<compile_context>
chip_gen: v5e
topology: v5e:2x2
jax: 0.10.0
libtpu: 0.0.40
codegen_flags: <defaults>
</compile_context>

<pallas_src>
import functools

import jax
import jax.numpy as jnp
from jax.experimental import pallas as pl
from jax.experimental.pallas import tpu as pltpu


def _round_up(x, m):
    return (x + m - 1) // m * m


def fold_weight_norm(v, g):
    """PyTorch weight_norm (dim=0): w = g * v / ||v|| over dims (1, 2)."""
    norm = jnp.sqrt(jnp.sum(v * v, axis=(1, 2), keepdims=True))
    return g.reshape(-1, 1, 1) * v / norm


def _tcn_kernel(xh_ref, xm_ref, w1_ref, wc_ref, o_ref, *,
                K, dilation, pad, padl, T_tile, Cout, Coutp, last_block,
                compute_dtype):
    # xh_ref: (1, 1, Cin, PADL)    128-aligned causal halo (real samples
    #                              right-aligned; zeros for global time < 0)
    # xm_ref: (1, Cin, T_tile)     this tile's input samples
    # w1_ref: (H, K*Cin + 1)       [conv1 taps | b1]
    # wc_ref: (2*Coutp, K*H+Cin+1) [w2 taps | 0 | b2 ; 0 | wr | br]
    # o_ref : (1, Cout, T_tile)
    j = pl.program_id(1)
    cd = compute_dtype

    main = xm_ref[0]                                        # (Cin, T_tile)
    if pad > 0:
        # Concatenate at a 128-lane boundary: no cross-lane roll of `main`.
        slab = jnp.concatenate([xh_ref[0, 0], main], axis=-1)  # (Cin, PADL+T_tile)
        base = padl - 2 * pad
    else:
        slab = main
        base = 0

    # ---- conv1 (+ bias + causal zero-mask folded into the matmul) ----------
    # h is computed over T_tile + pad columns so that conv2's causal halo of h
    # is recomputed locally (registers only, never stored).
    W1w = T_tile + pad
    # h column w sits at global time j*T_tile - pad + w; columns at negative
    # time must be conv2's ZERO padding (not ReLU(b1)).  Their x-taps are all
    # zero already, so multiplying a 0/1 validity row against the b1 weight
    # column realises both the bias add and the mask inside the MXU for free.
    col = jax.lax.broadcasted_iota(jnp.int32, (1, W1w), 1)
    valid = (col >= pad - j * T_tile).astype(cd)            # (1, W1w)
    taps1 = jnp.concatenate(
        [slab[:, base + k * dilation: base + k * dilation + W1w]
         for k in range(K)] + [valid], axis=0)              # (K*Cin + 1, W1w)
    h = jnp.dot(w1_ref[...], taps1, preferred_element_type=jnp.float32)
    h = jnp.maximum(h, 0.0).astype(cd)                      # ReLU; Dropout = identity (eval)

    # ---- conv2 + 1x1 residual + biases, all in a single MXU pass ------------
    ones = jnp.ones((1, T_tile), cd)
    rhs2 = jnp.concatenate(
        [h[:, k * dilation: k * dilation + T_tile] for k in range(K)]
        + [main, ones], axis=0)                             # (K*H + Cin + 1, T_tile)
    acc = jnp.dot(wc_ref[...], rhs2, preferred_element_type=jnp.float32)
    y = acc[:Cout]                                          # conv2 out + b2
    if not last_block:
        y = jnp.maximum(y, 0.0)                             # ReLU; Dropout = identity
    res = acc[Coutp:Coutp + Cout]                           # residual out + br
    o_ref[0] = (y + res).astype(o_ref.dtype)                # lane-dense store


def tcn_block_forward(x_ncl, w1, b1, w2, b2, wr, br, *, kernel_size, dilation,
                      last_block=False, deploy_residual=True,
                      t_tile=1024, compute_dtype=jnp.bfloat16,
                      out_dtype=jnp.float32):
    """TCN_block forward (eval semantics; weight_norm pre-folded).

    x_ncl: (B, Cin, T) float32, PyTorch NCL layout.
    w1: (H, Cin, K)    conv1 weight (weight_norm already folded).  b1: (H,)
    w2: (Cout, H, K)   conv2 weight (weight_norm already folded).  b2: (Cout,)
    wr: (Cout, Cin, 1) 1x1 residual conv weight.                   br: (Cout,)
    Returns (B, Cout, T) in out_dtype.
    """
    B, Cin, T = x_ncl.shape
    H = w1.shape[0]
    Cout = w2.shape[0]
    K = kernel_size
    pad = dilation * (K - 1)
    Coutp = _round_up(Cout, 8)

    # Lane-aligned halo width and time tile (multiple of 128, >= PADL).  The
    # 1024-lane default amortizes per-grid-step overhead while per-step blocks
    # stay < 200 KiB, far below scoped-VMEM defaults on v5e/v6e/v7x.
    PADL = max(_round_up(2 * pad, 128), 128)
    T_tile = max(min(_round_up(t_tile, 128), _round_up(T, 128)), PADL)
    NT = pl.cdiv(T, T_tile)
    T_p = NT * T_tile

    cd = compute_dtype
    x_r = jnp.pad(x_ncl.astype(cd), ((0, 0), (0, 0), (0, T_p - T)))
    # halo[b, j] = the PADL samples preceding tile j (zeros for t < 0), built
    # with a single pad + reshape + slice (no per-tile slice/stack loop).
    x_lp = jnp.pad(x_r, ((0, 0), (0, 0), (PADL, 0)))[:, :, :T_p]
    halo = jnp.transpose(
        x_lp.reshape(B, Cin, NT, T_tile)[:, :, :, :PADL], (0, 2, 1, 3))

    # conv1 weight with the bias folded in as an extra column (paired with the
    # kernel's 0/1 validity row): (H, K*Cin + 1).
    w1p = jnp.transpose(w1, (0, 2, 1)).reshape(H, K * Cin)
    w1e = jnp.concatenate([w1p, b1.reshape(H, 1)], axis=1).astype(cd)

    # conv2 + residual + biases fused into one weight: (2*Coutp, K*H + Cin + 1)
    #   rows [0, Cout)             -> [ w2 taps | 0  | b2 ]
    #   rows [Coutp, Coutp + Cout) -> [ 0       | wr | br ]
    wr2 = wr.reshape(Cout, Cin)
    if not deploy_residual:
        wr2 = jnp.zeros_like(wr2)
        br = jnp.zeros_like(br)
    w2p = jnp.transpose(w2, (0, 2, 1)).reshape(Cout, K * H)
    top = jnp.concatenate(
        [w2p, jnp.zeros((Cout, Cin), jnp.float32), b2.reshape(Cout, 1)], axis=1)
    bot = jnp.concatenate(
        [jnp.zeros((Cout, K * H), jnp.float32), wr2, br.reshape(Cout, 1)], axis=1)
    wc = jnp.zeros((2 * Coutp, K * H + Cin + 1), jnp.float32)
    wc = wc.at[:Cout].set(top).at[Coutp:Coutp + Cout].set(bot).astype(cd)

    kernel = functools.partial(
        _tcn_kernel, K=K, dilation=dilation, pad=pad, padl=PADL, T_tile=T_tile,
        Cout=Cout, Coutp=Coutp, last_block=last_block, compute_dtype=cd)

    out = pl.pallas_call(
        kernel,
        out_shape=jax.ShapeDtypeStruct((B, Cout, T_p), out_dtype),
        grid_spec=pltpu.PrefetchScalarGridSpec(
            num_scalar_prefetch=0,
            grid=(B, NT),
            in_specs=[
                pl.BlockSpec((1, 1, Cin, PADL), lambda b, j: (b, j, 0, 0)),
                pl.BlockSpec((1, Cin, T_tile), lambda b, j: (b, 0, j)),
                pl.BlockSpec((H, K * Cin + 1), lambda b, j: (0, 0)),
                pl.BlockSpec((2 * Coutp, K * H + Cin + 1), lambda b, j: (0, 0)),
            ],
            out_specs=pl.BlockSpec((1, Cout, T_tile), lambda b, j: (b, 0, j)),
        ),
        compiler_params=pltpu.CompilerParams(
            # Every (b, j) step is independent -> both axes megacore-parallel.
            dimension_semantics=("parallel", "parallel")),
    )(halo, x_r, w1e, wc)

    return out[:, :, :T]


def _reference(x, w1, b1, w2, b2, wr, br, *, kernel_size, dilation,
               last_block=False, deploy_residual=True,
               compute_dtype=jnp.bfloat16):
    """Plain-JAX reference mirroring the module (and the kernel's dtype casts)."""
    B, Cin, T = x.shape
    K, d = kernel_size, dilation
    pad = d * (K - 1)
    cd = compute_dtype
    f32 = jnp.float32

    def causal_conv(inp, w, b):
        ip = jnp.pad(inp.astype(cd), ((0, 0), (0, 0), (pad, 0)))
        taps = jnp.stack([ip[:, :, k * d:k * d + T] for k in range(K)], axis=1)
        y = jnp.einsum('ock,bkct->bot', w.astype(cd), taps,
                       preferred_element_type=f32)
        return y + b.astype(cd).astype(f32).reshape(1, -1, 1)

    h = jax.nn.relu(causal_conv(x, w1, b1))
    y = causal_conv(h, w2, b2)
    if not last_block:
        y = jax.nn.relu(y)
    if deploy_residual:
        res = jnp.einsum('oc,bct->bot', wr.reshape(-1, Cin).astype(cd),
                         x.astype(cd), preferred_element_type=f32)
        y = y + res + br.astype(cd).astype(f32).reshape(1, -1, 1)
    return y


if __name__ == "__main__":
    # Small shapes consistent with the module's typical use.
    B, Cin, H, Cout = 2, 16, 32, 16
    T, K, dilation = 200, 3, 2

    key = jax.random.PRNGKey(0)
    ks = jax.random.split(key, 8)

    x = jax.random.normal(ks[0], (B, Cin, T), jnp.float32)       # NCL input

    # Deterministic synthetic parameters (PyTorch layouts), weight_norm folded.
    v1 = jax.random.normal(ks[1], (H, Cin, K), jnp.float32) * 0.3
    g1 = 1.0 + 0.1 * jax.random.normal(ks[2], (H,), jnp.float32)
    b1 = 0.05 * jax.random.normal(ks[3], (H,), jnp.float32)
    v2 = jax.random.normal(ks[4], (Cout, H, K), jnp.float32) * 0.3
    g2 = 1.0 + 0.1 * jax.random.normal(ks[5], (Cout,), jnp.float32)
    b2 = 0.05 * jax.random.normal(ks[6], (Cout,), jnp.float32)
    wr = jax.random.normal(ks[7], (Cout, Cin, 1), jnp.float32) * 0.3
    br = jnp.zeros((Cout,), jnp.float32)

    w1 = fold_weight_norm(v1, g1)                                # (H, Cin, K)
    w2 = fold_weight_norm(v2, g2)                                # (Cout, H, K)
    common = dict(kernel_size=K, dilation=dilation)

    # f32 path, small tile -> 2 time tiles: exercises the aligned halo path
    # and the first-tile causal validity row.  Tight check.
    out = jax.block_until_ready(
        tcn_block_forward(x, w1, b1, w2, b2, wr, br, t_tile=128,
                          compute_dtype=jnp.float32, **common))
    ref = _reference(x, w1, b1, w2, b2, wr, br,
                     compute_dtype=jnp.float32, **common)
    assert out.shape == (B, Cout, T)
    assert jnp.allclose(out, ref, atol=1e-3, rtol=1e-3)

    # f32 path, default (large) tile -> single time tile.
    out1 = jax.block_until_ready(
        tcn_block_forward(x, w1, b1, w2, b2, wr, br,
                          compute_dtype=jnp.float32, **common))
    assert jnp.allclose(out1, ref, atol=1e-3, rtol=1e-3)

    # bf16 MXU path (recommended on v6e/v7x); compared loosely against a
    # bf16-matched reference (weight/bias rounding + accumulation-order drift).
    out_bf = jax.block_until_ready(
        tcn_block_forward(x, w1, b1, w2, b2, wr, br, t_tile=128,
                          compute_dtype=jnp.bfloat16, **common))
    ref_bf = _reference(x, w1, b1, w2, b2, wr, br,
                        compute_dtype=jnp.bfloat16, **common)
    assert jnp.allclose(out_bf, ref_bf, atol=1e-1, rtol=5e-2)

    # TODO(synk): training-mode Dropout (stochastic masking) is not
    # implemented; eval semantics (identity) are what this kernel reproduces.
    print("KERNEL_OK")
</pallas_src>

<mosaic_0001>
module attributes {stable_mosaic.version = 11 : i64} {
  func.func @_tcn_kernel(%arg0: i32, %arg1: i32, %arg2: memref<1x1x16x128xf32, #tpu.memory_space<vmem>>, %arg3: memref<1x16x128xf32, #tpu.memory_space<vmem>>, %arg4: memref<32x49xf32, #tpu.memory_space<vmem>>, %arg5: memref<32x113xf32, #tpu.memory_space<vmem>>, %arg6: memref<1x16x128xf32, #tpu.memory_space<vmem>>) attributes {dimension_semantics = [#tpu.dimension_semantics<parallel>, #tpu.dimension_semantics<parallel>], iteration_bounds = array<i64: 2, 2>, scalar_prefetch = 0 : i64, scratch_operands = 0 : i64, tpu.core_type = #tpu.core_type<tc>, window_params = [{transform_indices = @transform_0, window_bounds = array<i64: 1, 1, 16, 128>}, {transform_indices = @transform_1, window_bounds = array<i64: 1, 16, 128>}, {pipeline_mode = #tpu.pipeline_mode<synchronous>, transform_indices = @transform_2, window_bounds = array<i64: 32, 49>}, {pipeline_mode = #tpu.pipeline_mode<synchronous>, transform_indices = @transform_3, window_bounds = array<i64: 32, 113>}, {transform_indices = @transform_4, window_bounds = array<i64: 1, 16, 128>}]} {
    %c0 = arith.constant 0 : index
    %c0_0 = arith.constant 0 : index
    %c0_1 = arith.constant 0 : index
    %0 = vector.load %arg3[%c0, %c0_0, %c0_1] : memref<1x16x128xf32, #tpu.memory_space<vmem>>, vector<1x16x128xf32>
    %1 = vector.shape_cast %0 : vector<1x16x128xf32> to vector<16x128xf32>
    %c0_2 = arith.constant 0 : index
    %c0_3 = arith.constant 0 : index
    %c0_4 = arith.constant 0 : index
    %c0_5 = arith.constant 0 : index
    %2 = vector.load %arg2[%c0_2, %c0_3, %c0_4, %c0_5] : memref<1x1x16x128xf32, #tpu.memory_space<vmem>>, vector<1x1x16x128xf32>
    %3 = vector.shape_cast %2 : vector<1x1x16x128xf32> to vector<16x128xf32>
    %4 = tpu.concatenate %3, %1 in 1 : vector<16x128xf32>, vector<16x128xf32> -> vector<16x256xf32>
    %5 = tpu.iota {dimensions = array<i32: 1>} : vector<1x132xi32>
    %c128_i32 = arith.constant 128 : i32
    %6 = arith.muli %arg1, %c128_i32 : i32
    %c4_i32 = arith.constant 4 : i32
    %7 = arith.subi %c4_i32, %6 : i32
    %8 = vector.broadcast %7 : i32 to vector<1x132xi32>
    %9 = arith.cmpi sge, %5, %8 : vector<1x132xi32>
    %10 = arith.extui %9 : vector<1x132xi1> to vector<1x132xi32>
    %11 = arith.sitofp %10 : vector<1x132xi32> to vector<1x132xf32>
    %12 = vector.extract_strided_slice %4 {offsets = [0, 120], sizes = [16, 132], strides = [1, 1]} : vector<16x256xf32> to vector<16x132xf32>
    %13 = vector.extract_strided_slice %4 {offsets = [0, 122], sizes = [16, 132], strides = [1, 1]} : vector<16x256xf32> to vector<16x132xf32>
    %14 = vector.extract_strided_slice %4 {offsets = [0, 124], sizes = [16, 132], strides = [1, 1]} : vector<16x256xf32> to vector<16x132xf32>
    %15 = tpu.concatenate %12, %13, %14, %11 in 0 : vector<16x132xf32>, vector<16x132xf32>, vector<16x132xf32>, vector<1x132xf32> -> vector<49x132xf32>
    %c0_6 = arith.constant 0 : index
    %c0_7 = arith.constant 0 : index
    %16 = vector.load %arg4[%c0_6, %c0_7] : memref<32x49xf32, #tpu.memory_space<vmem>>, vector<32x49xf32>
    %cst = arith.constant dense<0.000000e+00> : vector<32x132xf32>
    %17 = tpu.matmul %16, %15, %cst {dimension_numbers = #tpu.dot_dimension_numbers<[1], [0], [0], [1], [0, 0, 1, 1], [], []>} : vector<32x49xf32>, vector<49x132xf32>, vector<32x132xf32> -> vector<32x132xf32>
    %cst_8 = arith.constant 0.000000e+00 : f32
    %18 = vector.broadcast %cst_8 : f32 to vector<32x132xf32>
    %19 = arith.maximumf %17, %18 : vector<32x132xf32>
    %cst_9 = arith.constant 1.000000e+00 : f32
    %20 = vector.broadcast %cst_9 : f32 to vector<1x128xf32>
    %21 = vector.extract_strided_slice %19 {offsets = [0, 0], sizes = [32, 128], strides = [1, 1]} : vector<32x132xf32> to vector<32x128xf32>
    %22 = vector.extract_strided_slice %19 {offsets = [0, 2], sizes = [32, 128], strides = [1, 1]} : vector<32x132xf32> to vector<32x128xf32>
    %23 = vector.extract_strided_slice %19 {offsets = [0, 4], sizes = [32, 128], strides = [1, 1]} : vector<32x132xf32> to vector<32x128xf32>
    %24 = tpu.concatenate %21, %22, %23, %1, %20 in 0 : vector<32x128xf32>, vector<32x128xf32>, vector<32x128xf32>, vector<16x128xf32>, vector<1x128xf32> -> vector<113x128xf32>
    %c0_10 = arith.constant 0 : index
    %c0_11 = arith.constant 0 : index
    %25 = vector.load %arg5[%c0_10, %c0_11] : memref<32x113xf32, #tpu.memory_space<vmem>>, vector<32x113xf32>
    %cst_12 = arith.constant dense<0.000000e+00> : vector<32x128xf32>
    %26 = tpu.matmul %25, %24, %cst_12 {dimension_numbers = #tpu.dot_dimension_numbers<[1], [0], [0], [1], [0, 0, 1, 1], [], []>} : vector<32x113xf32>, vector<113x128xf32>, vector<32x128xf32> -> vector<32x128xf32>
    %27 = vector.extract_strided_slice %26 {offsets = [0, 0], sizes = [16, 128], strides = [1, 1]} : vector<32x128xf32> to vector<16x128xf32>
    %cst_13 = arith.constant 0.000000e+00 : f32
    %28 = vector.broadcast %cst_13 : f32 to vector<16x128xf32>
    %29 = arith.maximumf %27, %28 : vector<16x128xf32>
    %30 = vector.extract_strided_slice %26 {offsets = [16, 0], sizes = [16, 128], strides = [1, 1]} : vector<32x128xf32> to vector<16x128xf32>
    %31 = arith.addf %29, %30 : vector<16x128xf32>
    %c0_14 = arith.constant 0 : index
    %c0_15 = arith.constant 0 : index
    %c0_16 = arith.constant 0 : index
    %32 = vector.load %arg6[%c0_14, %c0_15, %c0_16] : memref<1x16x128xf32, #tpu.memory_space<vmem>>, vector<1x16x128xf32>
    %33 = vector.shape_cast %32 : vector<1x16x128xf32> to vector<16x128xf32>
    %34 = vector.shape_cast %31 : vector<16x128xf32> to vector<1x16x128xf32>
    tpu.vector_store %arg6[%c0_14, %c0_15, %c0_16], %34 {strides = array<i32>} : memref<1x16x128xf32, #tpu.memory_space<vmem>>, vector<1x16x128xf32>,
    return
  }
  func.func @transform_0(%arg0: i32, %arg1: i32) -> (i32, i32, i32, i32) {
    %c0_i32 = arith.constant 0 : i32
    %c0_i32_0 = arith.constant 0 : i32
    %c0_i32_1 = arith.constant 0 : i32
    return %arg0, %arg1, %c0_i32, %c0_i32_0 : i32, i32, i32, i32
  }
  func.func @transform_1(%arg0: i32, %arg1: i32) -> (i32, i32, i32) {
    %c0_i32 = arith.constant 0 : i32
    %c0_i32_0 = arith.constant 0 : i32
    return %arg0, %c0_i32, %arg1 : i32, i32, i32
  }
  func.func @transform_2(%arg0: i32, %arg1: i32) -> (i32, i32) {
    %c0_i32 = arith.constant 0 : i32
    %c0_i32_0 = arith.constant 0 : i32
    %c0_i32_1 = arith.constant 0 : i32
    return %c0_i32, %c0_i32_0 : i32, i32
  }
  func.func @transform_3(%arg0: i32, %arg1: i32) -> (i32, i32) {
    %c0_i32 = arith.constant 0 : i32
    %c0_i32_0 = arith.constant 0 : i32
    %c0_i32_1 = arith.constant 0 : i32
    return %c0_i32, %c0_i32_0 : i32, i32
  }
  func.func @transform_4(%arg0: i32, %arg1: i32) -> (i32, i32, i32) {
    %c0_i32 = arith.constant 0 : i32
    %c0_i32_0 = arith.constant 0 : i32
    return %arg0, %c0_i32, %arg1 : i32, i32, i32
  }
}

</mosaic_0001>

<llo_original>
// kernel: tpu_custom_call.1
$region0: #{tpu_custom_call.1}
  #allocation0 [shape = 'u32[]', space=smem, size = 0x4, offset = 0x4, fixed_abs, tag = 'smem constant byte address 0x4 - core index']
  #allocation1 [shape = 'u32[72,128]{1,0:T(1,128)}', space=vmem, size = 0x9000, scoped, tag = 'internal scratch']
  %s0 = inlined_call_operand.hbm [shape: f32[2,2,16,128], index: 0, kind: input, shape index: {}]
  %s1 = inlined_call_operand.hbm [shape: f32[2,16,256], index: 1, kind: input, shape index: {}]
  %s2 = inlined_call_operand.hbm [shape: f32[32,49], index: 2, kind: input, shape index: {}]
  %s3 = inlined_call_operand.hbm [shape: f32[32,113], index: 3, kind: input, shape index: {}]
  %s4 = inlined_call_operand.hbm [shape: f32[2,16,256], index: 4, kind: output, shape index: {}]
  %s5 = sld [smem:[#allocation0]]
  $region65: #{tpu_custom_call.1} parent=0
    _
  %s7 = ssub.s32 1, %s5
  %s8 = scalar_select 0, %s7, %s5
  $region1: #{tpu_custom_call.1} parent=0
    #allocation2 [shape = 'u8[16384]{0}', space=vmem, size = 0x4000, scoped, tag = 'input window, operand 0']
    #allocation3 [shape = 's32[2]{0}', space=sflag, size = 0x8, scoped, tag = 'scoped memory for tpu_custom_call.1']
    #allocation4 [shape = 's32[2]{0}', space=sflag, size = 0x8, scoped, tag = 'scoped memory for tpu_custom_call.1']
    #allocation5 [shape = 'u8[16384]{0}', space=vmem, size = 0x4000, scoped, tag = 'input window, operand 1']
    #allocation6 [shape = 's32[2]{0}', space=sflag, size = 0x8, scoped, tag = 'scoped memory for tpu_custom_call.1']
    #allocation7 [shape = 'u8[16384]{0}', space=vmem, size = 0x4000, scoped, tag = 'input window, operand 2, single buffered']
    #allocation8 [shape = 'u8[16384]{0}', space=vmem, size = 0x4000, scoped, tag = 'input window, operand 3, single buffered']
    #allocation9 [shape = 's32[1]{0}', space=sflag, size = 0x4, scoped, tag = 'scoped memory for tpu_custom_call.1']
    #allocation10 [shape = 'u8[16384]{0}', space=vmem, size = 0x4000, scoped, tag = 'output window, operand 0']
    %9 = vsyncpa [#allocation3], 0
    %s10 = scalar_lea.sflag [#allocation3], 1
    %11 = vsyncpa %s10, 0
    %12 = vsyncpa [#allocation6], 0
    %s13 = scalar_lea.sflag [#allocation6], 1
    %14 = vsyncpa %s13, 0
    %15 = vsyncpa [#allocation9], 0
    %16 = vsyncpa [#allocation4], 0
    %s17 = scalar_lea.sflag [#allocation4], 1
    %18 = vsyncpa %s17, 0
    loop: start=0, step=1, limit=6
    $region2: #{tpu_custom_call.1} parent=1 // loop_pre_header
      _
    $region3: #{tpu_custom_call.1} parent=1 // loop_header
      %s20 = sphi 0, %s24
      %p21 = scmp.ge.s32.totalorder %s20, 6
      %s27 = sphi 0, %s39
      %s28 = sphi 0, %s35
      %s29 = sphi 0, %s27
      %s30 = sphi 0, %s28
      %s31 = sphi 0, %s29
      %s32 = sphi 0, %s30
      %s44 = sphi 0, %s46
      %s47 = sphi 0, %s44
      %s48 = sphi 0, %s47
      %s64 = sphi 0, %s48
      %s72 = sphi 0, %s74
      %s75 = sphi 0, %s72
      %s76 = sphi 0, %s75
      %s92 = sphi 0, %s76
      %s96 = sphi 0, %s96
      %s98 = sphi 0, %s96
      %s99 = sphi 0, %s98
      %s113 = sphi 0, %s99
      %s117 = sphi 0, %s117
      %s119 = sphi 0, %s117
      %s120 = sphi 0, %s119
      %s134 = sphi 0, %s120
      %s142 = sphi 0, %s144
      %s145 = sphi 0, %s142
      %s146 = sphi 0, %s145
      %s162 = sphi 0, %s146
    $region4: #{tpu_custom_call.1} parent=1 // loop_header_branch
      %23 = sbr.rel (%p21) target = $region8
    $region5: #{tpu_custom_call.1} parent=1 // loop_body
      %s25 = ssub.s32 %s20, 1
      %s26 = ssub.s32 %s20, 2
      %s33 = sadd.s32 1, %s28
      %p34 = scmp.ge.s32.totalorder %s33, 2
      %s35 = scalar_select %p34, 0, %s33
      %s36 = sadd.s32 1, %s27
      %s37 = scalar_select %p34, %s36, %s27
      %p38 = scmp.ge.s32.totalorder %s37, 2
      %s39 = scalar_select %p38, 0, %s37
      %s40 = ssub.s32 %s27, %s39
      %s41 = ssub.s32 %s28, %s35
      %s42 = sor.u32 %s40, %s41
      %p43 = scmp.eq.s32.totalorder %s42, 0
      %s45 = sadd.s32 %s44, 1
      %s46 = scalar_select %p43, %s44, %s45
      %p49 = pneg %p43
      %p50 = scmp.eq.s32.totalorder %s20, 3
      %p51 = por %p49, %p50
      %p52 = scmp.ne.s32.totalorder %s44, %s47
      %p53 = scmp.eq.s32.totalorder %s20, 0
      %p54 = por %p52, %p53
      %p55 = scmp.ne.s32.totalorder %s44, %s47
      %p56 = scmp.eq.s32.totalorder %s25, 3
      %p57 = por %p55, %p56
      %p58 = scmp.ne.s32.totalorder %s47, %s48
      %p59 = scmp.eq.s32.totalorder %s25, 0
      %p60 = por %p58, %p59
      %p61 = scmp.ne.s32.totalorder %s47, %s48
      %p62 = scmp.eq.s32.totalorder %s26, 3
      %p63 = por %p61, %p62
      %p65 = scmp.ne.s32.totalorder %s48, %s64
      %p66 = scmp.eq.s32.totalorder %s26, 0
      %p67 = por %p65, %p66
      %s68 = ssub.s32 %s27, %s39
      %s69 = ssub.s32 %s28, %s35
      %s70 = sor.u32 %s68, %s69
      %p71 = scmp.eq.s32.totalorder %s70, 0
      %s73 = sadd.s32 %s72, 1
      %s74 = scalar_select %p71, %s72, %s73
      %p77 = pneg %p71
      %p78 = scmp.eq.s32.totalorder %s20, 3
      %p79 = por %p77, %p78
      %p80 = scmp.ne.s32.totalorder %s72, %s75
      %p81 = scmp.eq.s32.totalorder %s20, 0
      %p82 = por %p80, %p81
      %p83 = scmp.ne.s32.totalorder %s72, %s75
      %p84 = scmp.eq.s32.totalorder %s25, 3
      %p85 = por %p83, %p84
      %p86 = scmp.ne.s32.totalorder %s75, %s76
      %p87 = scmp.eq.s32.totalorder %s25, 0
      %p88 = por %p86, %p87
      %p89 = scmp.ne.s32.totalorder %s75, %s76
      %p90 = scmp.eq.s32.totalorder %s26, 3
      %p91 = por %p89, %p90
      %p93 = scmp.ne.s32.totalorder %s76, %s92
      %p94 = scmp.eq.s32.totalorder %s26, 0
      %p95 = por %p93, %p94
      %s97 = sadd.s32 %s96, 1
      %p100 = scmp.eq.s32.totalorder %s20, 3
      %p101 = scmp.ne.s32.totalorder %s96, %s98
      %p102 = scmp.eq.s32.totalorder %s20, 0
      %p103 = por %p101, %p102
      %p104 = scmp.ne.s32.totalorder %s96, %s98
      %p105 = scmp.eq.s32.totalorder %s25, 3
      %p106 = por %p104, %p105
      %p107 = scmp.ne.s32.totalorder %s98, %s99
      %p108 = scmp.eq.s32.totalorder %s25, 0
      %p109 = por %p107, %p108
      %p110 = scmp.ne.s32.totalorder %s98, %s99
      %p111 = scmp.eq.s32.totalorder %s26, 3
      %p112 = por %p110, %p111
      %p114 = scmp.ne.s32.totalorder %s99, %s113
      %p115 = scmp.eq.s32.totalorder %s26, 0
      %p116 = por %p114, %p115
      %s118 = sadd.s32 %s117, 1
      %p121 = scmp.eq.s32.totalorder %s20, 3
      %p122 = scmp.ne.s32.totalorder %s117, %s119
      %p123 = scmp.eq.s32.totalorder %s20, 0
      %p124 = por %p122, %p123
      %p125 = scmp.ne.s32.totalorder %s117, %s119
      %p126 = scmp.eq.s32.totalorder %s25, 3
      %p127 = por %p125, %p126
      %p128 = scmp.ne.s32.totalorder %s119, %s120
      %p129 = scmp.eq.s32.totalorder %s25, 0
      %p130 = por %p128, %p129
      %p131 = scmp.ne.s32.totalorder %s119, %s120
      %p132 = scmp.eq.s32.totalorder %s26, 3
      %p133 = por %p131, %p132
      %p135 = scmp.ne.s32.totalorder %s120, %s134
      %p136 = scmp.eq.s32.totalorder %s26, 0
      %p137 = por %p135, %p136
      %s138 = ssub.s32 %s27, %s39
      %s139 = ssub.s32 %s28, %s35
      %s140 = sor.u32 %s138, %s139
      %p141 = scmp.eq.s32.totalorder %s140, 0
      %s143 = sadd.s32 %s142, 1
      %s144 = scalar_select %p141, %s142, %s143
      %p147 = pneg %p141
      %p148 = scmp.eq.s32.totalorder %s20, 3
      %p149 = por %p147, %p148
      %p150 = scmp.ne.s32.totalorder %s142, %s145
      %p151 = scmp.eq.s32.totalorder %s20, 0
      %p152 = por %p150, %p151
      %p153 = scmp.ne.s32.totalorder %s142, %s145
      %p154 = scmp.eq.s32.totalorder %s25, 3
      %p155 = por %p153, %p154
      %p156 = scmp.ne.s32.totalorder %s145, %s146
      %p157 = scmp.eq.s32.totalorder %s25, 0
      %p158 = por %p156, %p157
      %p159 = scmp.ne.s32.totalorder %s145, %s146
      %p160 = scmp.eq.s32.totalorder %s26, 3
      %p161 = por %p159, %p160
      %p163 = scmp.ne.s32.totalorder %s146, %s162
      %p164 = scmp.eq.s32.totalorder %s26, 0
      %p165 = por %p163, %p164
      %p166 = scmp.le.s32.totalorder 1, %s20
      %p167 = scmp.lt.s32.totalorder %s20, 5
      %p168 = pnand %p166, %p167
      %p169 = pneg %p168
      // Predicated region
      $region9: #{tpu_custom_call.1} parent=5 // pred_check
        _
      $region10: #{tpu_custom_call.1} parent=5 // pred_check_branch
        %171 = sbr.rel (%p168) target = $region12
      $region11: #{tpu_custom_call.1} parent=5 // pred_region
        %s172 = ssub.s32 %s20, 1
        // Predicated region
        $region13: #{tpu_custom_call.1} parent=11 // pred_check
          %p173 = pneg %p109
        $region14: #{tpu_custom_call.1} parent=11 // pred_check_branch
          %175 = sbr.rel (%p173) target = $region16
        $region15: #{tpu_custom_call.1} parent=11 // pred_region
          %177 = vsyncadd [#allocation6], 0
          %s178 = sshll.u32 %s2, 4
          %s179 = int_to_ptr.hbm [resolvable:$true] %s178
          %s180 = sshll.u32 [#allocation7], 4
          %s181 = int_to_ptr.vmem [resolvable:$true] %s180
          %186 = dma.hbm_to_vmem [thread:$0]  %s179, 512, %s181, [#allocation6], 128, 128, 8
        $region16: #{tpu_custom_call.1} parent=11 // pred_fallthru
          _
        // Predicated region
        $region17: #{tpu_custom_call.1} parent=11 // pred_check
          %p187 = pneg %p130
        $region18: #{tpu_custom_call.1} parent=11 // pred_check_branch
          %189 = sbr.rel (%p187) target = $region20
        $region19: #{tpu_custom_call.1} parent=11 // pred_region
          %191 = vsyncadd [#allocation9], 0
          %s192 = sshll.u32 %s3, 4
          %s193 = int_to_ptr.hbm [resolvable:$true] %s192
          %s194 = sshll.u32 [#allocation8], 4
          %s195 = int_to_ptr.vmem [resolvable:$true] %s194
          %200 = dma.hbm_to_vmem [thread:$0]  %s193, 512, %s195, [#allocation9], 128, 128, 8
        $region20: #{tpu_custom_call.1} parent=11 // pred_fallthru
          _
      $region12: #{tpu_custom_call.1} parent=5 // pred_fallthru
        _
      %p201 = scmp.lt.s32.totalorder %s20, 4
      // Predicated region
      $region21: #{tpu_custom_call.1} parent=5 // pred_check
        %p202 = pneg %p201
      $region22: #{tpu_custom_call.1} parent=5 // pred_check_branch
        %204 = sbr.rel (%p202) target = $region24
      $region23: #{tpu_custom_call.1} parent=5 // pred_region
        // Predicated region
        $region25: #{tpu_custom_call.1} parent=23 // pred_check
          %p205 = pneg %p54
        $region26: #{tpu_custom_call.1} parent=23 // pred_check_branch
          %207 = sbr.rel (%p205) target = $region28
        $region27: #{tpu_custom_call.1} parent=23 // pred_region
          %s208 = sand.u32 %s44, 1
          %s209 = scalar_lea.sflag [#allocation3], %s208
          %s210 = sand.u32 %s44, 1
          %s211 = smul.addr %s210, 16
          %s212 = scalar_lea.vmem [#allocation2], %s211
          %214 = vsyncadd %s209, 0
          %s215 = smul.addr %s28, 2
          %s216 = smul.addr %s27, 4
          %s217 = sadd.s32 %s215, %s216
          %s218 = smul.addr %s217, 8
          %s219 = scalar_lea.hbm %s0, %s218
          %s220 = sshll.u32 %s219, 4
          %s221 = int_to_ptr.hbm [resolvable:$true] %s220
          %s222 = sshll.u32 %s212, 4
          %s223 = int_to_ptr.vmem [resolvable:$true] %s222
          %228 = dma.hbm_to_vmem [thread:$0]  %s221, 256, %s223, %s209, 128, 128, 8
        $region28: #{tpu_custom_call.1} parent=23 // pred_fallthru
          _
        // Predicated region
        $region29: #{tpu_custom_call.1} parent=23 // pred_check
          %p229 = pneg %p82
        $region30: #{tpu_custom_call.1} parent=23 // pred_check_branch
          %231 = sbr.rel (%p229) target = $region32
        $region31: #{tpu_custom_call.1} parent=23 // pred_region
          %s232 = sand.u32 %s20, 1
          %s233 = scalar_lea.sflag [#allocation6], %s232
          %s234 = sand.u32 %s72, 1
          %s235 = smul.addr %s234, 16
          %s236 = scalar_lea.vmem [#allocation5], %s235
          %238 = vsyncadd %s233, 0
          %s239 = smul.addr %s27, 4
          %s240 = sadd.s32 %s28, %s239
          %s241 = smul.addr %s240, 8
          %s242 = scalar_lea.hbm %s1, %s241
          %s243 = sshll.u32 %s242, 4
          %s244 = int_to_ptr.hbm [resolvable:$true] %s243
          %s245 = sshll.u32 %s236, 4
          %s246 = int_to_ptr.vmem [resolvable:$true] %s245
          %251 = dma.hbm_to_vmem [thread:$0]  %s244, 256, %s246, %s233, 256, 128, 8
        $region32: #{tpu_custom_call.1} parent=23 // pred_fallthru
          _
      $region24: #{tpu_custom_call.1} parent=5 // pred_fallthru
        _
      %p252 = scmp.le.s32.totalorder 1, %s20
      %p253 = scmp.lt.s32.totalorder %s20, 5
      %p254 = pnand %p252, %p253
      %p255 = pneg %p254
      // Predicated region
      $region33: #{tpu_custom_call.1} parent=5 // pred_check
        _
      $region34: #{tpu_custom_call.1} parent=5 // pred_check_branch
        %257 = sbr.rel (%p254) target = $region36
      $region35: #{tpu_custom_call.1} parent=5 // pred_region
        %s258 = ssub.s32 %s20, 1
        %s259 = sand.u32 %s47, 1
        %s260 = scalar_lea.sflag [#allocation3], %s259
        %s261 = sand.u32 %s47, 1
        %s262 = smul.addr %s261, 16
        %s263 = scalar_lea.vmem [#allocation2], %s262
        // Predicated region
        $region37: #{tpu_custom_call.1} parent=35 // pred_check
          %p264 = pneg %p60
        $region38: #{tpu_custom_call.1} parent=35 // pred_check_branch
          %266 = sbr.rel (%p264) target = $region40
        $region39: #{tpu_custom_call.1} parent=35 // pred_region
          %268 = dma.done %s260, 256
        $region40: #{tpu_custom_call.1} parent=35 // pred_fallthru
          _
        %s269 = sand.u32 %s25, 1
        %s270 = scalar_lea.sflag [#allocation6], %s269
        %s271 = sand.u32 %s75, 1
        %s272 = smul.addr %s271, 16
        %s273 = scalar_lea.vmem [#allocation5], %s272
        // Predicated region
        $region41: #{tpu_custom_call.1} parent=35 // pred_check
          %p274 = pneg %p88
        $region42: #{tpu_custom_call.1} parent=35 // pred_check_branch
          %276 = sbr.rel (%p274) target = $region44
        $region43: #{tpu_custom_call.1} parent=35 // pred_region
          %278 = dma.done %s270, 256
        $region44: #{tpu_custom_call.1} parent=35 // pred_fallthru
          _
        // Predicated region
        $region45: #{tpu_custom_call.1} parent=35 // pred_check
          %p279 = pneg %p109
        $region46: #{tpu_custom_call.1} parent=35 // pred_check_branch
          %281 = sbr.rel (%p279) target = $region48
        $region47: #{tpu_custom_call.1} parent=35 // pred_region
          %283 = dma.done [#allocation6], 512
        $region48: #{tpu_custom_call.1} parent=35 // pred_fallthru
          _
        // Predicated region
        $region49: #{tpu_custom_call.1} parent=35 // pred_check
          %p284 = pneg %p130
        $region50: #{tpu_custom_call.1} parent=35 // pred_check_branch
          %286 = sbr.rel (%p284) target = $region52
        $region51: #{tpu_custom_call.1} parent=35 // pred_region
          %288 = dma.done [#allocation9], 512
        $region52: #{tpu_custom_call.1} parent=35 // pred_fallthru
          _
        %s289 = sand.u32 %s47, 1
        %s290 = scalar_lea.sflag [#allocation3], %s289
        %s291 = sand.u32 %s47, 1
        %s292 = smul.addr %s291, 16
        %s293 = scalar_lea.vmem [#allocation2], %s292
        %p294 = pneg %p60
        %p295 = pneg %p57
        %s296 = sand.u32 %s25, 1
        %s297 = scalar_lea.sflag [#allocation6], %s296
        %s298 = sand.u32 %s75, 1
        %s299 = smul.addr %s298, 16
        %s300 = scalar_lea.vmem [#allocation5], %s299
        %p301 = pneg %p88
        %p302 = pneg %p85
        %p303 = pneg %p109
        %p304 = pneg %p106
        %p305 = pneg %p130
        %p306 = pneg %p127
        %p307 = pneg %p158
        %p308 = pneg %p155
        %s309 = sand.u32 %s145, 1
        %s310 = scalar_lea.sflag [#allocation4], %s309
        %s311 = sand.u32 %s145, 1
        %s312 = smul.addr %s311, 16
        %s313 = scalar_lea.vmem [#allocation10], %s312
        %v314 = vld [vmem:[%s273] sm:$0xff]
        %v315 = vld [vmem:[%s273 + $0x8] sm:$0xff]
        %v316 = vld [vmem:[%s263] sm:$0xff]
        %v317 = vld [vmem:[%s263 + $0x8] sm:$0xff]
        %v318 = vlaneseq
        %v319 = vand.u32 %v318, 127
        %v320 = vadd.s32 %v319, 128
        %s321 = smul.u32 %s30, 128
        %s322 = ssub.s32 4, %s321
        %v323 = vstv %s322
        %vm324 = vcmp.ge.s32.totalorder %v319, %v323
        %vm325 = vcmp.ge.s32.totalorder %v320, %v323
        %v326 = vsel %vm324, 1, 0
        %v327 = vsel %vm325, 1, 0
        %v328 = vcvt.s32.f32 %v326
        %v329 = vcvt.s32.f32 %v327
        %334 = vrot.lane.b32.xlu0 %v316, 126
        %v335 = vpop.permute.xlu0 %334
        %336 = vrot.lane.b32.xlu0 %v314, 126
        %v337 = vpop.permute.xlu0 %336
        %338 = vrot.lane.b32.xlu0 %v317, 126
        %v339 = vpop.permute.xlu0 %338
        %340 = vrot.lane.b32.xlu0 %v315, 126
        %v341 = vpop.permute.xlu0 %340
        %vm342 = vcmask 1031168
        %v343 = vsel %vm342, %v335, %v337
        %v344 = vsel %vm342, %v339, %v341
        %345 = vrot.lane.b32.xlu0 %v316, 124
        %v346 = vpop.permute.xlu0 %345
        %347 = vrot.lane.b32.xlu0 %v314, 124
        %v348 = vpop.permute.xlu0 %347
        %349 = vrot.lane.b32.xlu0 %v317, 124
        %v350 = vpop.permute.xlu0 %349
        %351 = vrot.lane.b32.xlu0 %v315, 124
        %v352 = vpop.permute.xlu0 %351
        %vm353 = vcmask 1014784
        %v354 = vsel %vm353, %v346, %v348
        %v355 = vsel %vm353, %v350, %v352
        %358 = vrot.lane.b32.xlu0 %v328, 120
        %v359 = vpop.permute.xlu0 %358
        %360 = vrot.lane.b32.xlu0 %v329, 120
        %v361 = vpop.permute.xlu0 %360
        %vm362 = vcmask 982016
        %v363 = vsel %vm362, %v359, %v361
        %v364 = vld [vmem:[#allocation7] sm:$0xff]
        %v365 = vld [vmem:[#allocation7 + $0x8] sm:$0xff]
        %v366 = vld [vmem:[#allocation7 + $0x10] sm:$0xff]
        %v367 = vld [vmem:[#allocation7 + $0x18] sm:$0xff]
        %368 = vrot.lane.b32.xlu0 %v316, 8
        %v369 = vpop.permute.xlu0 %368
        %370 = vrot.lane.b32.xlu0 %v314, 8
        %v371 = vpop.permute.xlu0 %370
        %372 = vrot.lane.b32.xlu0 %v317, 8
        %v373 = vpop.permute.xlu0 %372
        %374 = vrot.lane.b32.xlu0 %v315, 8
        %v375 = vpop.permute.xlu0 %374
        %376 = vrot.lane.b32.xlu0 %v343, 8
        %v377 = vpop.permute.xlu0 %376
        %378 = vrot.lane.b32.xlu0 %v337, 8
        %v379 = vpop.permute.xlu0 %378
        %380 = vrot.lane.b32.xlu0 %v344, 8
        %v381 = vpop.permute.xlu0 %380
        %382 = vrot.lane.b32.xlu0 %v341, 8
        %v383 = vpop.permute.xlu0 %382
        %384 = vrot.lane.b32.xlu0 %v354, 8
        %v385 = vpop.permute.xlu0 %384
        %386 = vrot.lane.b32.xlu0 %v348, 8
        %v387 = vpop.permute.xlu0 %386
        %388 = vrot.lane.b32.xlu0 %v355, 8
        %v389 = vpop.permute.xlu0 %388
        %390 = vrot.lane.b32.xlu0 %v352, 8
        %v391 = vpop.permute.xlu0 %390
        %392 = vrot.lane.b32.xlu0 %v359, 8
        %v393 = vpop.permute.xlu0 %392
        %394 = vrot.lane.b32.xlu0 %v363, 8
        %v395 = vpop.permute.xlu0 %394
        %vm396 = vcmask 64512
        %v397 = vsel %vm396, %v369, %v371
        %v398 = vsel %vm396, %v373, %v375
        %v399 = vsel %vm396, %v377, %v379
        %v400 = vsel %vm396, %v381, %v383
        %v401 = vsel %vm396, %v385, %v387
        %v402 = vsel %vm396, %v389, %v391
        %v403 = vsel %vm396, %v393, %v395
        %vm416 = vcmask 400384
        %v418 = vsel %vm416, %v364, 0
        %v421 = vsel %vm416, %v365, 0
        %v424 = vsel %vm416, %v366, 0
        %v427 = vsel %vm416, %v367, 0
        %vm429 = vcmask 1040384
        %v430 = vsel %vm429, %v403, 0
        %v432 = vsel %vm429, %v395, 0
        %434 = vmatpush.msra.mxu0 0.0
        %435 = vmatpush.msra.mxu0 0.0
        %436 = vmatpush.msra.mxu0 0.0
        %437 = vmatpush.msra.mxu0 0.0
        %438 = vmatpush.msra.mxu0 0.0
        %439 = vmatpush.msra.mxu0 0.0
        %440 = vmatpush.msra.mxu0 0.0
        %441 = vmatpush.msra.mxu0 0.0
        %442 = vmatpush.msra.mxu0 0.0
        %443 = vmatpush.msra.mxu0 %v430
        %444 = vmatpush.msra.mxu0 %v402
        %445 = vmatpush.msra.mxu0 %v401
        %446 = vmatpush.msra.mxu0 %v400
        %447 = vmatpush.msra.mxu0 %v399
        %448 = vmatpush.msra.mxu0 %v398
        %449 = vmatpush.msra.mxu0 %v397
        %450 = vmatmul.f32.gmra.mxu0 %v418
        %v451 = vpop.f32.mrf.mxu0
        %v452 = vadd.f32 0.0, %v451
        %453 = vmatmul.f32.gmra.mxu0 %v421
        %v454 = vpop.f32.mrf.mxu0
        %v455 = vadd.f32 0.0, %v454
        %456 = vmatmul.f32.gmra.mxu0 %v424
        %v457 = vpop.f32.mrf.mxu0
        %v458 = vadd.f32 0.0, %v457
        %459 = vmatmul.f32.gmra.mxu0 %v427
        %v460 = vpop.f32.mrf.mxu0
        %v461 = vadd.f32 0.0, %v460
        %462 = vdwg.mxu0
        %463 = vmatpush.msra.mxu0 0.0
        %464 = vmatpush.msra.mxu0 0.0
        %465 = vmatpush.msra.mxu0 0.0
        %466 = vmatpush.msra.mxu0 0.0
        %467 = vmatpush.msra.mxu0 0.0
        %468 = vmatpush.msra.mxu0 0.0
        %469 = vmatpush.msra.mxu0 0.0
        %470 = vmatpush.msra.mxu0 0.0
        %471 = vmatpush.msra.mxu0 0.0
        %472 = vmatpush.msra.mxu0 %v432
        %473 = vmatpush.msra.mxu0 %v391
        %474 = vmatpush.msra.mxu0 %v387
        %475 = vmatpush.msra.mxu0 %v383
        %476 = vmatpush.msra.mxu0 %v379
        %477 = vmatpush.msra.mxu0 %v375
        %478 = vmatpush.msra.mxu0 %v371
        %479 = vmatmul.f32.gmra.mxu0 %v418
        %v480 = vpop.f32.mrf.mxu0
        %v481 = vadd.f32 0.0, %v480
        %482 = vmatmul.f32.gmra.mxu0 %v421
        %v483 = vpop.f32.mrf.mxu0
        %v484 = vadd.f32 0.0, %v483
        %485 = vmatmul.f32.gmra.mxu0 %v424
        %v486 = vpop.f32.mrf.mxu0
        %v487 = vadd.f32 0.0, %v486
        %488 = vmatmul.f32.gmra.mxu0 %v427
        %v489 = vpop.f32.mrf.mxu0
        %v490 = vadd.f32 0.0, %v489
        %491 = vdwg.mxu0
        %v492 = vmax.f32 %v452, 0.0
        %v493 = vmax.f32 %v481, 0.0
        %v494 = vmax.f32 %v455, 0.0
        %v495 = vmax.f32 %v484, 0.0
        %v496 = vmax.f32 %v458, 0.0
        %v497 = vmax.f32 %v487, 0.0
        %v498 = vmax.f32 %v461, 0.0
        %v499 = vmax.f32 %v490, 0.0
        %508 = vrot.lane.b32.xlu0 %v492, 126
        %v509 = vpop.permute.xlu0 %508
        %510 = vrot.lane.b32.xlu0 %v493, 126
        %v511 = vpop.permute.xlu0 %510
        %512 = vrot.lane.b32.xlu0 %v494, 126
        %v513 = vpop.permute.xlu0 %512
        %514 = vrot.lane.b32.xlu0 %v495, 126
        %v515 = vpop.permute.xlu0 %514
        %516 = vrot.lane.b32.xlu0 %v496, 126
        %v517 = vpop.permute.xlu0 %516
        %518 = vrot.lane.b32.xlu0 %v497, 126
        %v519 = vpop.permute.xlu0 %518
        %520 = vrot.lane.b32.xlu0 %v498, 126
        %v521 = vpop.permute.xlu0 %520
        %522 = vrot.lane.b32.xlu0 %v499, 126
        %v523 = vpop.permute.xlu0 %522
        %v524 = vsel %vm342, %v509, %v511
        %v525 = vsel %vm342, %v513, %v515
        %v526 = vsel %vm342, %v517, %v519
        %v527 = vsel %vm342, %v521, %v523
        %532 = vrot.lane.b32.xlu0 %v492, 124
        %v533 = vpop.permute.xlu0 %532
        %534 = vrot.lane.b32.xlu0 %v493, 124
        %v535 = vpop.permute.xlu0 %534
        %536 = vrot.lane.b32.xlu0 %v494, 124
        %v537 = vpop.permute.xlu0 %536
        %538 = vrot.lane.b32.xlu0 %v495, 124
        %v539 = vpop.permute.xlu0 %538
        %540 = vrot.lane.b32.xlu0 %v496, 124
        %v541 = vpop.permute.xlu0 %540
        %542 = vrot.lane.b32.xlu0 %v497, 124
        %v543 = vpop.permute.xlu0 %542
        %544 = vrot.lane.b32.xlu0 %v498, 124
        %v545 = vpop.permute.xlu0 %544
        %546 = vrot.lane.b32.xlu0 %v499, 124
        %v547 = vpop.permute.xlu0 %546
        %v548 = vsel %vm353, %v533, %v535
        %v549 = vsel %vm353, %v537, %v539
        %v550 = vsel %vm353, %v541, %v543
        %v551 = vsel %vm353, %v545, %v547
        %v556 = vld [vmem:[#allocation8] sm:$0xff]
        %v557 = vld [vmem:[#allocation8 + $0x8] sm:$0xff]
        %v558 = vld [vmem:[#allocation8 + $0x10] sm:$0xff]
        %v559 = vld [vmem:[#allocation8 + $0x18] sm:$0xff]
        %vm560 = vcmask 924672
        %v562 = vsel %vm560, %v556, 0
        %v565 = vsel %vm560, %v557, 0
        %v568 = vsel %vm560, %v558, 0
        %v571 = vsel %vm560, %v559, 0
        %v574 = vsel %vm429, 1.0, 0
        %576 = vmatpush.msra.mxu0 0.0
        %577 = vmatpush.msra.mxu0 %v574
        %578 = vmatpush.msra.mxu0 %v315
        %579 = vmatpush.msra.mxu0 %v314
        %580 = vmatpush.msra.mxu0 %v551
        %581 = vmatpush.msra.mxu0 %v550
        %582 = vmatpush.msra.mxu0 %v549
        %583 = vmatpush.msra.mxu0 %v548
        %584 = vmatpush.msra.mxu0 %v527
        %585 = vmatpush.msra.mxu0 %v526
        %586 = vmatpush.msra.mxu0 %v525
        %587 = vmatpush.msra.mxu0 %v524
        %588 = vmatpush.msra.mxu0 %v498
        %589 = vmatpush.msra.mxu0 %v496
        %590 = vmatpush.msra.mxu0 %v494
        %591 = vmatpush.msra.mxu0 %v492
        %592 = vmatmul.f32.gmra.mxu0 %v562
        %v593 = vpop.f32.mrf.mxu0
        %v594 = vadd.f32 0.0, %v593
        %595 = vmatmul.f32.gmra.mxu0 %v565
        %v596 = vpop.f32.mrf.mxu0
        %v597 = vadd.f32 0.0, %v596
        %598 = vmatmul.f32.gmra.mxu0 %v568
        %v599 = vpop.f32.mrf.mxu0
        %v600 = vadd.f32 0.0, %v599
        %601 = vmatmul.f32.gmra.mxu0 %v571
        %v602 = vpop.f32.mrf.mxu0
        %v603 = vadd.f32 0.0, %v602
        %604 = vdwg.mxu0
        %v605 = vmax.f32 %v594, 0.0
        %v606 = vmax.f32 %v597, 0.0
        %v607 = vadd.f32 %v605, %v600
        %v608 = vadd.f32 %v606, %v603
        %609 = vst [vmem:[%s313] sm:$0xff] %v607
        %610 = vst [vmem:[%s313 + $0x8] sm:$0xff] %v608
        %s611 = sand.u32 %s145, 1
        %s612 = scalar_lea.sflag [#allocation4], %s611
        %s613 = sand.u32 %s145, 1
        %s614 = smul.addr %s613, 16
        %s615 = scalar_lea.vmem [#allocation10], %s614
        // Predicated region
        $region53: #{tpu_custom_call.1} parent=35 // pred_check
          %p616 = pneg %p155
        $region54: #{tpu_custom_call.1} parent=35 // pred_check_branch
          %618 = sbr.rel (%p616) target = $region56
        $region55: #{tpu_custom_call.1} parent=35 // pred_region
          %620 = vsyncadd %s612, 0
          %s621 = smul.addr %s29, 4
          %s622 = sadd.s32 %s30, %s621
          %s623 = smul.addr %s622, 8
          %s624 = scalar_lea.hbm %s4, %s623
          %s625 = sshll.u32 %s615, 4
          %s626 = int_to_ptr.vmem [resolvable:$true] %s625
          %s627 = sshll.u32 %s624, 4
          %s628 = int_to_ptr.hbm [resolvable:$true] %s627
          %633 = dma.vmem_to_hbm [thread:$0]  %s626, 256, %s628, %s612, 128, 256, 8
        $region56: #{tpu_custom_call.1} parent=35 // pred_fallthru
          _
      $region36: #{tpu_custom_call.1} parent=5 // pred_fallthru
        _
      %p634 = scmp.le.s32.totalorder 2, %s20
      // Predicated region
      $region57: #{tpu_custom_call.1} parent=5 // pred_check
        %p635 = pneg %p634
      $region58: #{tpu_custom_call.1} parent=5 // pred_check_branch
        %637 = sbr.rel (%p635) target = $region60
      $region59: #{tpu_custom_call.1} parent=5 // pred_region
        %s638 = ssub.s32 %s20, 2
        // Predicated region
        $region61: #{tpu_custom_call.1} parent=59 // pred_check
          %p639 = pneg %p161
        $region62: #{tpu_custom_call.1} parent=59 // pred_check_branch
          %641 = sbr.rel (%p639) target = $region64
        $region63: #{tpu_custom_call.1} parent=59 // pred_region
          %s642 = sand.u32 %s146, 1
          %s643 = scalar_lea.sflag [#allocation4], %s642
          %s644 = sand.u32 %s146, 1
          %s645 = smul.addr %s644, 16
          %s646 = scalar_lea.vmem [#allocation10], %s645
          %648 = dma.done %s643, 256
        $region64: #{tpu_custom_call.1} parent=59 // pred_fallthru
          _
      $region60: #{tpu_custom_call.1} parent=5 // pred_fallthru
        _
    $region6: #{tpu_custom_call.1} parent=1 // loop_footer
      %s24 = sadd.s32 1, %s20
    $region7: #{tpu_custom_call.1} parent=1 // loop_footer_branch
      %19 = sbr.rel target = $region3
    $region8: #{tpu_custom_call.1} parent=1 // loop_exit
      _
    %649 = vsyncpa [#allocation3], 1
    %s650 = scalar_lea.sflag [#allocation3], 1
    %651 = vsyncpa %s650, 1
    %652 = vsyncpa [#allocation6], 1
    %s653 = scalar_lea.sflag [#allocation6], 1
    %654 = vsyncpa %s653, 1
    %655 = vsyncpa [#allocation9], 1
    %656 = vsyncpa [#allocation4], 1
    %s657 = scalar_lea.sflag [#allocation4], 1
    %658 = vsyncpa %s657, 1

</llo_original>
